<compile_context>
chip_gen: v6e
topology: v6e:2x2x1
jax: 0.10.0
libtpu: 0.0.40
codegen_flags: <defaults>
</compile_context>

<pallas_src>
import jax
import jax.numpy as jnp
import numpy as np
from jax.experimental import pallas as pl
from jax.experimental.pallas import tpu as pltpu


def _t_softmax(inp, t):
    """t_softmax(input, t) along last axis (matches pytorch_tabular.t_softmax)."""
    maxes = jnp.max(inp, axis=-1, keepdims=True)
    m = inp - maxes
    w = jnp.maximum(m + t, 0.0) + 1e-8
    logits = m + jnp.log(w)
    logits = logits - jnp.max(logits, axis=-1, keepdims=True)
    e = jnp.exp(logits)
    return e / jnp.sum(e, axis=-1, keepdims=True)


def gflu_kernel(x_ref, wx_ref, b_ref, whzr_ref, woh_ref, out_ref):
    """All operands fully VMEM-resident; stages statically unrolled.

    x_ref    : (B, F)        compute dtype (f32 or bf16)
    wx_ref   : (F, S*3F)     packed x-side weights, per stage [W_zx | W_rx | W_ox]
    b_ref    : (1, S*3F)     packed biases, per stage [b_z | b_r | b_o], f32
    whzr_ref : (S, F, 2F)    per-stage h-side gate weights [W_zh | W_rh]
    woh_ref  : (S, F, F)     per-stage h-side candidate weights W_oh
    out_ref  : (B, F)
    """
    F = out_ref.shape[1]
    S = whzr_ref.shape[0]

    x = x_ref[...]                                   # (B, F), compute dtype
    # Loop-invariant x-side pre-activations for ALL stages in one packed dot,
    # with all biases folded in (single broadcast add, done once).
    xw = (jnp.dot(x, wx_ref[...], preferred_element_type=jnp.float32)
          + b_ref[...])                              # (B, S*3F), f32

    h = x.astype(jnp.float32)                        # carried state in vregs, f32

    for d in range(S):                               # static unroll over stages
        base = d * 3 * F
        zr_x = xw[:, base: base + 2 * F]             # x-side z|r terms (+bias)
        o_x = xw[:, base + 2 * F: base + 3 * F]      # x-side o term   (+bias)

        # one (B,F)@(F,2F) dot + one fused sigmoid for both gates
        zr = jax.nn.sigmoid(
            zr_x + jnp.dot(h.astype(whzr_ref.dtype), whzr_ref[d],
                           preferred_element_type=jnp.float32))
        z = zr[:, :F]
        r = zr[:, F:]

        h_out = jnp.tanh(
            o_x + jnp.dot((r * h).astype(woh_ref.dtype), woh_ref[d],
                          preferred_element_type=jnp.float32))

        h = (1.0 - z) * h + z * h_out                # dropout(p=0.0) == identity

    out_ref[...] = h.astype(out_ref.dtype)


def _forward(x, params, *, weights_dtype):
    """x: (B, F) float32.  params: dict of stacked per-stage GFLU parameters."""
    B, F = x.shape
    fm = params["feature_masks"][:, 0, :]            # (S, F)
    t = jnp.maximum(params["t"][:, 0, 0], 0.0)       # (S,)  relu(t)
    W_in, b_in = params["W_in"], params["b_in"]      # (S,2F,2F), (S,1,2F)
    W_out, b_out = params["W_out"], params["b_out"]  # (S,2F,F),  (S,1,F)
    S = fm.shape[0]

    # ---- parameter-only preprocessing (hoisted out of the kernel) ----------
    mask = _t_softmax(fm, t[:, None])                # (S, F)
    m = mask[:, :, None]                             # (S, F, 1)
    # cat([mask*x, h]) @ W_in split into z/r halves; mask folded into x-rows.
    W_zx = m * W_in[:, :F, :F]                       # (S, F, F)
    W_rx = m * W_in[:, :F, F:]                       # (S, F, F)
    W_zh = W_in[:, F:, :F]                           # (S, F, F)
    W_rh = W_in[:, F:, F:]                           # (S, F, F)
    # cat([r*h, x]) @ W_out split by rows.
    W_oh = W_out[:, :F, :]                           # (S, F, F)
    W_ox = W_out[:, F:, :]                           # (S, F, F)

    # x-side weights packed to (F, S*3F): per-stage column blocks [zx | rx | ox].
    Wx = jnp.stack([W_zx, W_rx, W_ox], axis=1)       # (S, 3, F, F)
    Wx = Wx.transpose(2, 0, 1, 3).reshape(F, S * 3 * F)
    # matching packed biases (1, S*3F), kept in f32.
    b_pack = jnp.stack([b_in[:, 0, :F], b_in[:, 0, F:], b_out[:, 0, :]],
                       axis=1).reshape(1, S * 3 * F).astype(jnp.float32)
    # h-side gate weights packed to (S, F, 2F): [zh | rh].
    W_hzr = jnp.concatenate([W_zh, W_rh], axis=2)    # (S, F, 2F)

    x_c = x.astype(weights_dtype)
    Wx = Wx.astype(weights_dtype)
    W_hzr = W_hzr.astype(weights_dtype)
    W_oh = W_oh.astype(weights_dtype)

    vmem = pl.BlockSpec(memory_space=pltpu.MemorySpace.VMEM)
    return pl.pallas_call(
        gflu_kernel,
        out_shape=jax.ShapeDtypeStruct((B, F), x.dtype),
        in_specs=[vmem] * 5,
        out_specs=vmem,
    )(x_c, Wx, b_pack, W_hzr, W_oh)


gandalf_backbone_forward = jax.jit(_forward, static_argnames=("weights_dtype",))


def reference_forward(x, params):
    """Pure-JAX f32 reference of the original (concatenated) forward pass."""
    fm = params["feature_masks"][:, 0, :]   # (S, F)
    t = params["t"][:, 0, 0]                # (S,)
    S, F = fm.shape
    h = x
    for d in range(S):
        mask = _t_softmax(fm[d][None, :], jnp.maximum(t[d], 0.0))
        feature = mask * x
        h_in = jnp.concatenate([feature, h], -1) @ params["W_in"][d] + params["b_in"][d, 0]
        z = jax.nn.sigmoid(h_in[:, :F])
        r = jax.nn.sigmoid(h_in[:, F:])
        h_out = jnp.tanh(
            jnp.concatenate([r * h, x], -1) @ params["W_out"][d] + params["b_out"][d, 0])
        h = (1.0 - z) * h + z * h_out
    return h


def init_params(key, n_stages, n_features):
    """Deterministic synthetic parameters with GFLU shapes."""
    F = n_features
    ks = jax.random.split(key, 6)
    scale = 1.0 / np.sqrt(2 * F)
    return {
        "feature_masks": jax.random.uniform(ks[0], (n_stages, 1, F), jnp.float32),
        "t": jax.random.uniform(ks[1], (n_stages, 1, 1), jnp.float32,
                                minval=0.0, maxval=1.0),
        "W_in": jax.random.uniform(ks[2], (n_stages, 2 * F, 2 * F), jnp.float32,
                                   minval=-scale, maxval=scale),
        "b_in": jax.random.uniform(ks[3], (n_stages, 1, 2 * F), jnp.float32,
                                   minval=-scale, maxval=scale),
        "W_out": jax.random.uniform(ks[4], (n_stages, 2 * F, F), jnp.float32,
                                    minval=-scale, maxval=scale),
        "b_out": jax.random.uniform(ks[5], (n_stages, 1, F), jnp.float32,
                                    minval=-scale, maxval=scale),
    }


if __name__ == "__main__":
    # Module config: cat_embedding_dims=[(10,8),(7,8)], n_continuous_features=16
    #   -> n_features = 16 + 16 = 32;  gflu_stages = 3;  dropout = 0.0.
    n_continuous_features = 16
    cat_embedding_dims = [(10, 8), (7, 8)]
    n_features = n_continuous_features + sum(d for _, d in cat_embedding_dims)  # 32
    gflu_stages = 3
    batch = 8

    key = jax.random.PRNGKey(0)
    kx, kp = jax.random.split(key)
    # GANDALFBackbone.forward takes the already-embedded feature tensor (B, F).
    x = jax.random.normal(kx, (batch, n_features), jnp.float32)
    params = init_params(kp, gflu_stages, n_features)

    ref = reference_forward(x, params)

    # f32 path: exact-semantics check against the reference.
    out_f32 = jax.block_until_ready(
        gandalf_backbone_forward(x, params, weights_dtype=jnp.float32))
    np.testing.assert_allclose(np.asarray(out_f32), np.asarray(ref),
                               rtol=1e-5, atol=1e-5)

    # bf16-weights path (default perf config): halved DMA bytes / bf16 MXU.
    out_bf16 = jax.block_until_ready(
        gandalf_backbone_forward(x, params, weights_dtype=jnp.bfloat16))
    np.testing.assert_allclose(np.asarray(out_bf16), np.asarray(ref),
                               rtol=5e-2, atol=5e-2)

    assert out_f32.shape == (batch, n_features)
    assert out_bf16.shape == (batch, n_features)
    print("KERNEL_OK")
</pallas_src>

<mosaic_0001>
module attributes {stable_mosaic.version = 11 : i64} {
  func.func @gflu_kernel(%arg0: memref<8x32xf32, #tpu.memory_space<vmem>>, %arg1: memref<32x288xf32, #tpu.memory_space<vmem>>, %arg2: memref<1x288xf32, #tpu.memory_space<vmem>>, %arg3: memref<3x32x64xf32, #tpu.memory_space<vmem>>, %arg4: memref<3x32x32xf32, #tpu.memory_space<vmem>>, %arg5: memref<8x32xf32, #tpu.memory_space<vmem>>) attributes {dimension_semantics = [], scalar_prefetch = 0 : i64, scratch_operands = 0 : i64, tpu.core_type = #tpu.core_type<tc>} {
    %c0 = arith.constant 0 : index
    %c0_0 = arith.constant 0 : index
    %0 = vector.load %arg0[%c0, %c0_0] : memref<8x32xf32, #tpu.memory_space<vmem>>, vector<8x32xf32>
    %c0_1 = arith.constant 0 : index
    %c0_2 = arith.constant 0 : index
    %1 = vector.load %arg1[%c0_1, %c0_2] : memref<32x288xf32, #tpu.memory_space<vmem>>, vector<32x288xf32>
    %cst = arith.constant dense<0.000000e+00> : vector<8x288xf32>
    %2 = tpu.matmul %0, %1, %cst {dimension_numbers = #tpu.dot_dimension_numbers<[1], [0], [0], [1], [0, 0, 1, 1], [], []>} : vector<8x32xf32>, vector<32x288xf32>, vector<8x288xf32> -> vector<8x288xf32>
    %c0_3 = arith.constant 0 : index
    %c0_4 = arith.constant 0 : index
    %3 = vector.load %arg2[%c0_3, %c0_4] : memref<1x288xf32, #tpu.memory_space<vmem>>, vector<1x288xf32>
    %4 = vector.broadcast %3 : vector<1x288xf32> to vector<8x288xf32>
    %5 = arith.addf %2, %4 : vector<8x288xf32>
    %6 = vector.extract_strided_slice %5 {offsets = [0, 0], sizes = [8, 64], strides = [1, 1]} : vector<8x288xf32> to vector<8x64xf32>
    %7 = vector.extract_strided_slice %5 {offsets = [0, 64], sizes = [8, 32], strides = [1, 1]} : vector<8x288xf32> to vector<8x32xf32>
    %c0_5 = arith.constant 0 : index
    %c0_6 = arith.constant 0 : index
    %c0_7 = arith.constant 0 : index
    %8 = vector.load %arg3[%c0_5, %c0_6, %c0_7] : memref<3x32x64xf32, #tpu.memory_space<vmem>>, vector<1x32x64xf32>
    %9 = vector.shape_cast %8 : vector<1x32x64xf32> to vector<32x64xf32>
    %cst_8 = arith.constant dense<0.000000e+00> : vector<8x64xf32>
    %10 = tpu.matmul %0, %9, %cst_8 {dimension_numbers = #tpu.dot_dimension_numbers<[1], [0], [0], [1], [0, 0, 1, 1], [], []>} : vector<8x32xf32>, vector<32x64xf32>, vector<8x64xf32> -> vector<8x64xf32>
    %11 = arith.addf %6, %10 : vector<8x64xf32>
    %12 = arith.negf %11 : vector<8x64xf32>
    %13 = math.exp %12 : vector<8x64xf32>
    %cst_9 = arith.constant 1.000000e+00 : f32
    %14 = vector.broadcast %cst_9 : f32 to vector<8x64xf32>
    %15 = arith.addf %14, %13 : vector<8x64xf32>
    %16 = arith.divf %14, %15 : vector<8x64xf32>
    %17 = vector.extract_strided_slice %16 {offsets = [0, 0], sizes = [8, 32], strides = [1, 1]} : vector<8x64xf32> to vector<8x32xf32>
    %18 = vector.extract_strided_slice %16 {offsets = [0, 32], sizes = [8, 32], strides = [1, 1]} : vector<8x64xf32> to vector<8x32xf32>
    %19 = arith.mulf %18, %0 : vector<8x32xf32>
    %c0_10 = arith.constant 0 : index
    %c0_11 = arith.constant 0 : index
    %c0_12 = arith.constant 0 : index
    %20 = vector.load %arg4[%c0_10, %c0_11, %c0_12] : memref<3x32x32xf32, #tpu.memory_space<vmem>>, vector<1x32x32xf32>
    %21 = vector.shape_cast %20 : vector<1x32x32xf32> to vector<32x32xf32>
    %cst_13 = arith.constant dense<0.000000e+00> : vector<8x32xf32>
    %22 = tpu.matmul %19, %21, %cst_13 {dimension_numbers = #tpu.dot_dimension_numbers<[1], [0], [0], [1], [0, 0, 1, 1], [], []>} : vector<8x32xf32>, vector<32x32xf32>, vector<8x32xf32> -> vector<8x32xf32>
    %23 = arith.addf %7, %22 : vector<8x32xf32>
    %24 = math.tanh %23 : vector<8x32xf32>
    %cst_14 = arith.constant 1.000000e+00 : f32
    %25 = vector.broadcast %cst_14 : f32 to vector<8x32xf32>
    %26 = arith.subf %25, %17 : vector<8x32xf32>
    %27 = arith.mulf %26, %0 : vector<8x32xf32>
    %28 = arith.mulf %17, %24 : vector<8x32xf32>
    %29 = arith.addf %27, %28 : vector<8x32xf32>
    %30 = vector.extract_strided_slice %5 {offsets = [0, 96], sizes = [8, 64], strides = [1, 1]} : vector<8x288xf32> to vector<8x64xf32>
    %31 = vector.extract_strided_slice %5 {offsets = [0, 160], sizes = [8, 32], strides = [1, 1]} : vector<8x288xf32> to vector<8x32xf32>
    %c1 = arith.constant 1 : index
    %c0_15 = arith.constant 0 : index
    %c0_16 = arith.constant 0 : index
    %32 = vector.load %arg3[%c1, %c0_15, %c0_16] : memref<3x32x64xf32, #tpu.memory_space<vmem>>, vector<1x32x64xf32>
    %33 = vector.shape_cast %32 : vector<1x32x64xf32> to vector<32x64xf32>
    %cst_17 = arith.constant dense<0.000000e+00> : vector<8x64xf32>
    %34 = tpu.matmul %29, %33, %cst_17 {dimension_numbers = #tpu.dot_dimension_numbers<[1], [0], [0], [1], [0, 0, 1, 1], [], []>} : vector<8x32xf32>, vector<32x64xf32>, vector<8x64xf32> -> vector<8x64xf32>
    %35 = arith.addf %30, %34 : vector<8x64xf32>
    %36 = arith.negf %35 : vector<8x64xf32>
    %37 = math.exp %36 : vector<8x64xf32>
    %cst_18 = arith.constant 1.000000e+00 : f32
    %38 = vector.broadcast %cst_18 : f32 to vector<8x64xf32>
    %39 = arith.addf %38, %37 : vector<8x64xf32>
    %40 = arith.divf %38, %39 : vector<8x64xf32>
    %41 = vector.extract_strided_slice %40 {offsets = [0, 0], sizes = [8, 32], strides = [1, 1]} : vector<8x64xf32> to vector<8x32xf32>
    %42 = vector.extract_strided_slice %40 {offsets = [0, 32], sizes = [8, 32], strides = [1, 1]} : vector<8x64xf32> to vector<8x32xf32>
    %43 = arith.mulf %42, %29 : vector<8x32xf32>
    %c1_19 = arith.constant 1 : index
    %c0_20 = arith.constant 0 : index
    %c0_21 = arith.constant 0 : index
    %44 = vector.load %arg4[%c1_19, %c0_20, %c0_21] : memref<3x32x32xf32, #tpu.memory_space<vmem>>, vector<1x32x32xf32>
    %45 = vector.shape_cast %44 : vector<1x32x32xf32> to vector<32x32xf32>
    %cst_22 = arith.constant dense<0.000000e+00> : vector<8x32xf32>
    %46 = tpu.matmul %43, %45, %cst_22 {dimension_numbers = #tpu.dot_dimension_numbers<[1], [0], [0], [1], [0, 0, 1, 1], [], []>} : vector<8x32xf32>, vector<32x32xf32>, vector<8x32xf32> -> vector<8x32xf32>
    %47 = arith.addf %31, %46 : vector<8x32xf32>
    %48 = math.tanh %47 : vector<8x32xf32>
    %cst_23 = arith.constant 1.000000e+00 : f32
    %49 = vector.broadcast %cst_23 : f32 to vector<8x32xf32>
    %50 = arith.subf %49, %41 : vector<8x32xf32>
    %51 = arith.mulf %50, %29 : vector<8x32xf32>
    %52 = arith.mulf %41, %48 : vector<8x32xf32>
    %53 = arith.addf %51, %52 : vector<8x32xf32>
    %54 = vector.extract_strided_slice %5 {offsets = [0, 192], sizes = [8, 64], strides = [1, 1]} : vector<8x288xf32> to vector<8x64xf32>
    %55 = vector.extract_strided_slice %5 {offsets = [0, 256], sizes = [8, 32], strides = [1, 1]} : vector<8x288xf32> to vector<8x32xf32>
    %c2 = arith.constant 2 : index
    %c0_24 = arith.constant 0 : index
    %c0_25 = arith.constant 0 : index
    %56 = vector.load %arg3[%c2, %c0_24, %c0_25] : memref<3x32x64xf32, #tpu.memory_space<vmem>>, vector<1x32x64xf32>
    %57 = vector.shape_cast %56 : vector<1x32x64xf32> to vector<32x64xf32>
    %cst_26 = arith.constant dense<0.000000e+00> : vector<8x64xf32>
    %58 = tpu.matmul %53, %57, %cst_26 {dimension_numbers = #tpu.dot_dimension_numbers<[1], [0], [0], [1], [0, 0, 1, 1], [], []>} : vector<8x32xf32>, vector<32x64xf32>, vector<8x64xf32> -> vector<8x64xf32>
    %59 = arith.addf %54, %58 : vector<8x64xf32>
    %60 = arith.negf %59 : vector<8x64xf32>
    %61 = math.exp %60 : vector<8x64xf32>
    %cst_27 = arith.constant 1.000000e+00 : f32
    %62 = vector.broadcast %cst_27 : f32 to vector<8x64xf32>
    %63 = arith.addf %62, %61 : vector<8x64xf32>
    %64 = arith.divf %62, %63 : vector<8x64xf32>
    %65 = vector.extract_strided_slice %64 {offsets = [0, 0], sizes = [8, 32], strides = [1, 1]} : vector<8x64xf32> to vector<8x32xf32>
    %66 = vector.extract_strided_slice %64 {offsets = [0, 32], sizes = [8, 32], strides = [1, 1]} : vector<8x64xf32> to vector<8x32xf32>
    %67 = arith.mulf %66, %53 : vector<8x32xf32>
    %c2_28 = arith.constant 2 : index
    %c0_29 = arith.constant 0 : index
    %c0_30 = arith.constant 0 : index
    %68 = vector.load %arg4[%c2_28, %c0_29, %c0_30] : memref<3x32x32xf32, #tpu.memory_space<vmem>>, vector<1x32x32xf32>
    %69 = vector.shape_cast %68 : vector<1x32x32xf32> to vector<32x32xf32>
    %cst_31 = arith.constant dense<0.000000e+00> : vector<8x32xf32>
    %70 = tpu.matmul %67, %69, %cst_31 {dimension_numbers = #tpu.dot_dimension_numbers<[1], [0], [0], [1], [0, 0, 1, 1], [], []>} : vector<8x32xf32>, vector<32x32xf32>, vector<8x32xf32> -> vector<8x32xf32>
    %71 = arith.addf %55, %70 : vector<8x32xf32>
    %72 = math.tanh %71 : vector<8x32xf32>
    %cst_32 = arith.constant 1.000000e+00 : f32
    %73 = vector.broadcast %cst_32 : f32 to vector<8x32xf32>
    %74 = arith.subf %73, %65 : vector<8x32xf32>
    %75 = arith.mulf %74, %53 : vector<8x32xf32>
    %76 = arith.mulf %65, %72 : vector<8x32xf32>
    %77 = arith.addf %75, %76 : vector<8x32xf32>
    %c0_33 = arith.constant 0 : index
    %c0_34 = arith.constant 0 : index
    %78 = vector.load %arg5[%c0_33, %c0_34] : memref<8x32xf32, #tpu.memory_space<vmem>>, vector<8x32xf32>
    tpu.vector_store %arg5[%c0_33, %c0_34], %77 {strides = array<i32>} : memref<8x32xf32, #tpu.memory_space<vmem>>, vector<8x32xf32>,
    return
  }
}

</mosaic_0001>

<llo_original>
// kernel: _forward.1
$region0: #{_forward.1}
  #allocation0 [shape = 'u32[]', space=smem, size = 0x4, offset = 0x4, fixed_abs, tag = 'smem constant byte address 0x4 - core index']
  #allocation1 [shape = 'u32[144,128]{1,0:T(1,128)}', space=vmem, size = 0x12000, scoped, tag = 'internal scratch']
  %s0 = inlined_call_operand.vmem [shape: f32[8,32], index: 0, kind: input, shape index: {}]
  %s1 = inlined_call_operand.vmem [shape: f32[32,288], index: 1, kind: input, shape index: {}]
  %s2 = inlined_call_operand.vmem [shape: f32[1,288], index: 2, kind: input, shape index: {}]
  %s3 = inlined_call_operand.vmem [shape: f32[3,32,64], index: 3, kind: input, shape index: {}]
  %s4 = inlined_call_operand.vmem [shape: f32[3,32,32], index: 4, kind: input, shape index: {}]
  %s5 = inlined_call_operand.hbm [shape: f32[8,32], index: 5, kind: output, shape index: {}]
  %s6 = sld [smem:[#allocation0]]
  $region30: #{_forward.1} parent=0
    _
  %s8 = ssub.s32 1, %s6
  %s9 = scalar_select 0, %s8, %s6
  $region1: #{_forward.1} parent=0
    #allocation2 [shape = 'u8[4096]{0}', space=vmem, size = 0x1000, scoped, tag = 'output window, operand 0, single buffered']
    #allocation3 [shape = 's32[1]{0}', space=sflag, size = 0x4, scoped, tag = 'scoped memory for _forward.1']
    %10 = vsyncpa [#allocation3], 0
    // Predicated region
    $region2: #{_forward.1} parent=1 // pred_check
      _
    $region3: #{_forward.1} parent=1 // pred_check_branch
      %12 = sbr.rel (0) target = $region5
    $region4: #{_forward.1} parent=1 // pred_region
      _
    $region5: #{_forward.1} parent=1 // pred_fallthru
      _
    // Predicated region
    $region6: #{_forward.1} parent=1 // pred_check
      _
    $region7: #{_forward.1} parent=1 // pred_check_branch
      %14 = sbr.rel (0) target = $region9
    $region8: #{_forward.1} parent=1 // pred_region
      _
    $region9: #{_forward.1} parent=1 // pred_fallthru
      _
    // Predicated region
    $region10: #{_forward.1} parent=1 // pred_check
      _
    $region11: #{_forward.1} parent=1 // pred_check_branch
      %16 = sbr.rel (0) target = $region13
    $region12: #{_forward.1} parent=1 // pred_region
      _
    $region13: #{_forward.1} parent=1 // pred_fallthru
      _
    // Predicated region
    $region14: #{_forward.1} parent=1 // pred_check
      _
    $region15: #{_forward.1} parent=1 // pred_check_branch
      %18 = sbr.rel (0) target = $region17
    $region16: #{_forward.1} parent=1 // pred_region
      _
    $region17: #{_forward.1} parent=1 // pred_fallthru
      _
    // Predicated region
    $region18: #{_forward.1} parent=1 // pred_check
      _
    $region19: #{_forward.1} parent=1 // pred_check_branch
      %20 = sbr.rel (0) target = $region21
    $region20: #{_forward.1} parent=1 // pred_region
      _
    $region21: #{_forward.1} parent=1 // pred_fallthru
      _
    %v21 = vld [vmem:[%s0] sm:$0xff]
    %v22 = vld [vmem:[%s1] sm:$0xff]
    %v23 = vld [vmem:[%s1 + $0x8] sm:$0xff]
    %v24 = vld [vmem:[%s1 + $0x10] sm:$0xff]
    %v25 = vld [vmem:[%s1 + $0x18] sm:$0xff]
    %v26 = vld [vmem:[%s1 + $0x20] sm:$0xff]
    %v27 = vld [vmem:[%s1 + $0x28] sm:$0xff]
    %v28 = vld [vmem:[%s1 + $0x30] sm:$0xff]
    %v29 = vld [vmem:[%s1 + $0x38] sm:$0xff]
    %v30 = vld [vmem:[%s1 + $0x40] sm:$0xff]
    %v31 = vld [vmem:[%s1 + $0x48] sm:$0xff]
    %v32 = vld [vmem:[%s1 + $0x50] sm:$0xff]
    %v33 = vld [vmem:[%s1 + $0x58] sm:$0xff]
    %v34 = vld [vmem:[%s2] sm:$0x7]
    %v36 = vlaneseq
    %v37 = vshrl.u32 %v36, 7
    %v38 = vsub.s32 0, %v37
    %v39 = vrot.slane %v34, %v38
    %v40 = vlaneseq
    %v41 = vshrl.u32 %v40, 7
    %v42 = vsub.s32 1, %v41
    %v43 = vrot.slane %v34, %v42
    %v44 = vlaneseq
    %v45 = vshrl.u32 %v44, 7
    %v46 = vsub.s32 2, %v45
    %v47 = vrot.slane %v34, %v46
    %vm51 = vcmask 261120
    %v53 = vsel %vm51, %v21, 0
    %55 = vmatprep.subr.mxu0 0.0
    %56 = vmatpush1.msra.mxu0 0.0
    %57 = vmatprep.subr.mxu0 0.0
    %58 = vmatpush1.msra.mxu0 0.0
    %59 = vmatprep.subr.mxu0 0.0
    %60 = vmatpush1.msra.mxu0 0.0
    %61 = vmatprep.subr.mxu0 0.0
    %62 = vmatpush1.msra.mxu0 0.0
    %63 = vmatprep.subr.mxu0 0.0
    %64 = vmatpush1.msra.mxu0 0.0
    %65 = vmatprep.subr.mxu0 0.0
    %66 = vmatpush1.msra.mxu0 0.0
    %67 = vmatprep.subr.mxu0 0.0
    %68 = vmatpush1.msra.mxu0 0.0
    %69 = vmatprep.subr.mxu0 0.0
    %70 = vmatpush1.msra.mxu0 0.0
    %71 = vmatprep.subr.mxu0 0.0
    %72 = vmatpush1.msra.mxu0 0.0
    %73 = vmatprep.subr.mxu0 0.0
    %74 = vmatpush1.msra.mxu0 0.0
    %75 = vmatprep.subr.mxu0 0.0
    %76 = vmatpush1.msra.mxu0 0.0
    %77 = vmatprep.subr.mxu0 0.0
    %78 = vmatpush1.msra.mxu0 0.0
    %79 = vmatprep.subr.mxu0 %v32
    %80 = vmatpush1.msra.mxu0 %v31
    %81 = vmatprep.subr.mxu0 %v29
    %82 = vmatpush1.msra.mxu0 %v28
    %83 = vmatprep.subr.mxu0 %v26
    %84 = vmatpush1.msra.mxu0 %v25
    %85 = vmatprep.subr.mxu0 %v23
    %86 = vmatpush1.msra.mxu0 %v22
    %87 = vmatprep.subr.mxu0 0.0
    %88 = vmatpush2.msra.mxu0 0.0
    %89 = vmatprep.subr.mxu0 0.0
    %90 = vmatpush2.msra.mxu0 0.0
    %91 = vmatprep.subr.mxu0 0.0
    %92 = vmatpush2.msra.mxu0 0.0
    %93 = vmatprep.subr.mxu0 0.0
    %94 = vmatpush2.msra.mxu0 0.0
    %95 = vmatprep.subr.mxu0 0.0
    %96 = vmatpush2.msra.mxu0 0.0
    %97 = vmatprep.subr.mxu0 0.0
    %98 = vmatpush2.msra.mxu0 0.0
    %99 = vmatprep.subr.mxu0 0.0
    %100 = vmatpush2.msra.mxu0 0.0
    %101 = vmatprep.subr.mxu0 0.0
    %102 = vmatpush2.msra.mxu0 0.0
    %103 = vmatprep.subr.mxu0 0.0
    %104 = vmatpush2.msra.mxu0 0.0
    %105 = vmatprep.subr.mxu0 0.0
    %106 = vmatpush2.msra.mxu0 0.0
    %107 = vmatprep.subr.mxu0 0.0
    %108 = vmatpush2.msra.mxu0 0.0
    %109 = vmatprep.subr.mxu0 0.0
    %110 = vmatpush2.msra.mxu0 0.0
    %111 = vmatprep.subr.mxu0 0.0
    %112 = vmatpush2.msra.mxu0 0.0
    %113 = vmatprep.subr.mxu0 0.0
    %114 = vmatpush2.msra.mxu0 0.0
    %115 = vmatprep.subr.mxu0 0.0
    %116 = vmatpush2.msra.mxu0 0.0
    %117 = vmatprep.subr.mxu0 0.0
    %118 = vmatpush2.msra.mxu0 0.0
    %119 = vmatprep.mubr.f32.mxu0 0.0
    %120 = vmatmul.mubr.f32.gmra.mxu0 %v53
    %v121 = vpop.f32.mrf.mxu0
    %v122 = vadd.f32 %v39, %v121
    %v123 = vpop.f32.mrf.mxu0
    %v124 = vadd.f32 %v43, %v123
    %125 = vdwg.mxu0
    %126 = vmatprep.subr.mxu0 0.0
    %127 = vmatpush1.msra.mxu0 0.0
    %128 = vmatprep.subr.mxu0 0.0
    %129 = vmatpush1.msra.mxu0 0.0
    %130 = vmatprep.subr.mxu0 0.0
    %131 = vmatpush1.msra.mxu0 0.0
    %132 = vmatprep.subr.mxu0 0.0
    %133 = vmatpush1.msra.mxu0 0.0
    %134 = vmatprep.subr.mxu0 0.0
    %135 = vmatpush1.msra.mxu0 0.0
    %136 = vmatprep.subr.mxu0 0.0
    %137 = vmatpush1.msra.mxu0 0.0
    %138 = vmatprep.subr.mxu0 0.0
    %139 = vmatpush1.msra.mxu0 0.0
    %140 = vmatprep.subr.mxu0 0.0
    %141 = vmatpush1.msra.mxu0 0.0
    %142 = vmatprep.subr.mxu0 0.0
    %143 = vmatpush1.msra.mxu0 0.0
    %144 = vmatprep.subr.mxu0 0.0
    %145 = vmatpush1.msra.mxu0 0.0
    %146 = vmatprep.subr.mxu0 0.0
    %147 = vmatpush1.msra.mxu0 0.0
    %148 = vmatprep.subr.mxu0 0.0
    %149 = vmatpush1.msra.mxu0 0.0
    %150 = vmatprep.subr.mxu0 0.0
    %151 = vmatpush1.msra.mxu0 %v33
    %152 = vmatprep.subr.mxu0 0.0
    %153 = vmatpush1.msra.mxu0 %v30
    %154 = vmatprep.subr.mxu0 0.0
    %155 = vmatpush1.msra.mxu0 %v27
    %156 = vmatprep.subr.mxu0 0.0
    %157 = vmatpush1.msra.mxu0 %v24
    %158 = vmatprep.subr.mxu0 0.0
    %159 = vmatpush2.msra.mxu0 0.0
    %160 = vmatprep.subr.mxu0 0.0
    %161 = vmatpush2.msra.mxu0 0.0
    %162 = vmatprep.subr.mxu0 0.0
    %163 = vmatpush2.msra.mxu0 0.0
    %164 = vmatprep.subr.mxu0 0.0
    %165 = vmatpush2.msra.mxu0 0.0
    %166 = vmatprep.subr.mxu0 0.0
    %167 = vmatpush2.msra.mxu0 0.0
    %168 = vmatprep.subr.mxu0 0.0
    %169 = vmatpush2.msra.mxu0 0.0
    %170 = vmatprep.subr.mxu0 0.0
    %171 = vmatpush2.msra.mxu0 0.0
    %172 = vmatprep.subr.mxu0 0.0
    %173 = vmatpush2.msra.mxu0 0.0
    %174 = vmatprep.subr.mxu0 0.0
    %175 = vmatpush2.msra.mxu0 0.0
    %176 = vmatprep.subr.mxu0 0.0
    %177 = vmatpush2.msra.mxu0 0.0
    %178 = vmatprep.subr.mxu0 0.0
    %179 = vmatpush2.msra.mxu0 0.0
    %180 = vmatprep.subr.mxu0 0.0
    %181 = vmatpush2.msra.mxu0 0.0
    %182 = vmatprep.subr.mxu0 0.0
    %183 = vmatpush2.msra.mxu0 0.0
    %184 = vmatprep.subr.mxu0 0.0
    %185 = vmatpush2.msra.mxu0 0.0
    %186 = vmatprep.subr.mxu0 0.0
    %187 = vmatpush2.msra.mxu0 0.0
    %188 = vmatprep.subr.mxu0 0.0
    %189 = vmatpush2.msra.mxu0 0.0
    %190 = vmatprep.mubr.f32.mxu0 0.0
    %191 = vmatmul.mubr.f32.gmra.mxu0 %v53
    %v192 = vpop.f32.mrf.mxu0
    %v193 = vadd.f32 %v47, %v192
    %v194 = vpop.f32.mrf.mxu0
    %195 = vdwg.mxu0
    %v196 = vld [vmem:[%s3] sm:$0xff]
    %v197 = vld [vmem:[%s3 + $0x8] sm:$0xff]
    %v198 = vld [vmem:[%s3 + $0x10] sm:$0xff]
    %v199 = vld [vmem:[%s3 + $0x18] sm:$0xff]
    %200 = vmatprep.subr.mxu0 0.0
    %201 = vmatpush1.msra.mxu0 0.0
    %202 = vmatprep.subr.mxu0 0.0
    %203 = vmatpush1.msra.mxu0 0.0
    %204 = vmatprep.subr.mxu0 0.0
    %205 = vmatpush1.msra.mxu0 0.0
    %206 = vmatprep.subr.mxu0 0.0
    %207 = vmatpush1.msra.mxu0 0.0
    %208 = vmatprep.subr.mxu0 0.0
    %209 = vmatpush1.msra.mxu0 0.0
    %210 = vmatprep.subr.mxu0 0.0
    %211 = vmatpush1.msra.mxu0 0.0
    %212 = vmatprep.subr.mxu0 0.0
    %213 = vmatpush1.msra.mxu0 0.0
    %214 = vmatprep.subr.mxu0 0.0
    %215 = vmatpush1.msra.mxu0 0.0
    %216 = vmatprep.subr.mxu0 0.0
    %217 = vmatpush1.msra.mxu0 0.0
    %218 = vmatprep.subr.mxu0 0.0
    %219 = vmatpush1.msra.mxu0 0.0
    %220 = vmatprep.subr.mxu0 0.0
    %221 = vmatpush1.msra.mxu0 0.0
    %222 = vmatprep.subr.mxu0 0.0
    %223 = vmatpush1.msra.mxu0 0.0
    %224 = vmatprep.subr.mxu0 0.0
    %225 = vmatpush1.msra.mxu0 %v199
    %226 = vmatprep.subr.mxu0 0.0
    %227 = vmatpush1.msra.mxu0 %v198
    %228 = vmatprep.subr.mxu0 0.0
    %229 = vmatpush1.msra.mxu0 %v197
    %230 = vmatprep.subr.mxu0 0.0
    %231 = vmatpush1.msra.mxu0 %v196
    %232 = vmatprep.subr.mxu0 0.0
    %233 = vmatpush2.msra.mxu0 0.0
    %234 = vmatprep.subr.mxu0 0.0
    %235 = vmatpush2.msra.mxu0 0.0
    %236 = vmatprep.subr.mxu0 0.0
    %237 = vmatpush2.msra.mxu0 0.0
    %238 = vmatprep.subr.mxu0 0.0
    %239 = vmatpush2.msra.mxu0 0.0
    %240 = vmatprep.subr.mxu0 0.0
    %241 = vmatpush2.msra.mxu0 0.0
    %242 = vmatprep.subr.mxu0 0.0
    %243 = vmatpush2.msra.mxu0 0.0
    %244 = vmatprep.subr.mxu0 0.0
    %245 = vmatpush2.msra.mxu0 0.0
    %246 = vmatprep.subr.mxu0 0.0
    %247 = vmatpush2.msra.mxu0 0.0
    %248 = vmatprep.subr.mxu0 0.0
    %249 = vmatpush2.msra.mxu0 0.0
    %250 = vmatprep.subr.mxu0 0.0
    %251 = vmatpush2.msra.mxu0 0.0
    %252 = vmatprep.subr.mxu0 0.0
    %253 = vmatpush2.msra.mxu0 0.0
    %254 = vmatprep.subr.mxu0 0.0
    %255 = vmatpush2.msra.mxu0 0.0
    %256 = vmatprep.subr.mxu0 0.0
    %257 = vmatpush2.msra.mxu0 0.0
    %258 = vmatprep.subr.mxu0 0.0
    %259 = vmatpush2.msra.mxu0 0.0
    %260 = vmatprep.subr.mxu0 0.0
    %261 = vmatpush2.msra.mxu0 0.0
    %262 = vmatprep.subr.mxu0 0.0
    %263 = vmatpush2.msra.mxu0 0.0
    %264 = vmatprep.mubr.f32.mxu0 0.0
    %265 = vmatmul.mubr.f32.gmra.mxu0 %v53
    %v266 = vpop.f32.mrf.mxu0
    %v267 = vadd.f32 0.0, %v266
    %v268 = vpop.f32.mrf.mxu0
    %269 = vdwg.mxu0
    %v270 = vadd.f32 %v122, %v267
    %v271 = vxor.u32 %v270, 2147483648
    %v272 = vmul.f32 %v271, 1.442695
    %v273 = vpow.pop %v272
    %v274 = vadd.f32 %v273, 1.0
    %v275 = vrcp.pop %v274
    %v276 = vmul.f32 1.0, %v275
    %277 = vrot.lane.b32.xlu0 %v21, 32
    %v278 = vpop.permute.xlu0 %277
    %v280 = vmul.f32 %v276, %v278
    %v281 = vld [vmem:[%s4] sm:$0xff]
    %v282 = vld [vmem:[%s4 + $0x8] sm:$0xff]
    %v283 = vld [vmem:[%s4 + $0x10] sm:$0xff]
    %v284 = vld [vmem:[%s4 + $0x18] sm:$0xff]
    %286 = vrot.lane.b32.xlu0 %v280, 96
    %v287 = vpop.permute.xlu0 %286
    %v288 = vsel %vm51, %v287, 0
    %290 = vmatprep.subr.mxu0 0.0
    %291 = vmatpush1.msra.mxu0 0.0
    %292 = vmatprep.subr.mxu0 0.0
    %293 = vmatpush1.msra.mxu0 0.0
    %294 = vmatprep.subr.mxu0 0.0
    %295 = vmatpush1.msra.mxu0 0.0
    %296 = vmatprep.subr.mxu0 0.0
    %297 = vmatpush1.msra.mxu0 0.0
    %298 = vmatprep.subr.mxu0 0.0
    %299 = vmatpush1.msra.mxu0 0.0
    %300 = vmatprep.subr.mxu0 0.0
    %301 = vmatpush1.msra.mxu0 0.0
    %302 = vmatprep.subr.mxu0 0.0
    %303 = vmatpush1.msra.mxu0 0.0
    %304 = vmatprep.subr.mxu0 0.0
    %305 = vmatpush1.msra.mxu0 0.0
    %306 = vmatprep.subr.mxu0 0.0
    %307 = vmatpush1.msra.mxu0 0.0
    %308 = vmatprep.subr.mxu0 0.0
    %309 = vmatpush1.msra.mxu0 0.0
    %310 = vmatprep.subr.mxu0 0.0
    %311 = vmatpush1.msra.mxu0 0.0
    %312 = vmatprep.subr.mxu0 0.0
    %313 = vmatpush1.msra.mxu0 0.0
    %314 = vmatprep.subr.mxu0 0.0
    %315 = vmatpush1.msra.mxu0 %v284
    %316 = vmatprep.subr.mxu0 0.0
    %317 = vmatpush1.msra.mxu0 %v283
    %318 = vmatprep.subr.mxu0 0.0
    %319 = vmatpush1.msra.mxu0 %v282
    %320 = vmatprep.subr.mxu0 0.0
    %321 = vmatpush1.msra.mxu0 %v281
    %322 = vmatprep.subr.mxu0 0.0
    %323 = vmatpush2.msra.mxu0 0.0
    %324 = vmatprep.subr.mxu0 0.0
    %325 = vmatpush2.msra.mxu0 0.0
    %326 = vmatprep.subr.mxu0 0.0
    %327 = vmatpush2.msra.mxu0 0.0
    %328 = vmatprep.subr.mxu0 0.0
    %329 = vmatpush2.msra.mxu0 0.0
    %330 = vmatprep.subr.mxu0 0.0
    %331 = vmatpush2.msra.mxu0 0.0
    %332 = vmatprep.subr.mxu0 0.0
    %333 = vmatpush2.msra.mxu0 0.0
    %334 = vmatprep.subr.mxu0 0.0
    %335 = vmatpush2.msra.mxu0 0.0
    %336 = vmatprep.subr.mxu0 0.0
    %337 = vmatpush2.msra.mxu0 0.0
    %338 = vmatprep.subr.mxu0 0.0
    %339 = vmatpush2.msra.mxu0 0.0
    %340 = vmatprep.subr.mxu0 0.0
    %341 = vmatpush2.msra.mxu0 0.0
    %342 = vmatprep.subr.mxu0 0.0
    %343 = vmatpush2.msra.mxu0 0.0
    %344 = vmatprep.subr.mxu0 0.0
    %345 = vmatpush2.msra.mxu0 0.0
    %346 = vmatprep.subr.mxu0 0.0
    %347 = vmatpush2.msra.mxu0 0.0
    %348 = vmatprep.subr.mxu0 0.0
    %349 = vmatpush2.msra.mxu0 0.0
    %350 = vmatprep.subr.mxu0 0.0
    %351 = vmatpush2.msra.mxu0 0.0
    %352 = vmatprep.subr.mxu0 0.0
    %353 = vmatpush2.msra.mxu0 0.0
    %354 = vmatprep.mubr.f32.mxu0 0.0
    %355 = vmatmul.mubr.f32.gmra.mxu0 %v288
    %v356 = vpop.f32.mrf.mxu0
    %v357 = vadd.f32 0.0, %v356
    %v358 = vpop.f32.mrf.mxu0
    %359 = vdwg.mxu0
    %361 = vrot.lane.b32.xlu0 %v357, 64
    %v362 = vpop.permute.xlu0 %361
    %v364 = vadd.f32 %v122, %v362
    %v365 = vtanh.pop %v364
    %v366 = vsub.f32 1.0, %v276
    %v367 = vmul.f32 %v366, %v21
    %369 = vrot.lane.b32.xlu0 %v365, 64
    %v370 = vpop.permute.xlu0 %369
    %v372 = vmul.f32 %v276, %v370
    %v373 = vadd.f32 %v367, %v372
    %s374 = scalar_lea.vmem %s3, 32
    %v375 = vld [vmem:[%s374] sm:$0xff]
    %v376 = vld [vmem:[%s374 + $0x8] sm:$0xff]
    %v377 = vld [vmem:[%s374 + $0x10] sm:$0xff]
    %v378 = vld [vmem:[%s374 + $0x18] sm:$0xff]
    %v380 = vsel %vm51, %v373, 0
    %382 = vmatprep.subr.mxu0 0.0
    %383 = vmatpush1.msra.mxu0 0.0
    %384 = vmatprep.subr.mxu0 0.0
    %385 = vmatpush1.msra.mxu0 0.0
    %386 = vmatprep.subr.mxu0 0.0
    %387 = vmatpush1.msra.mxu0 0.0
    %388 = vmatprep.subr.mxu0 0.0
    %389 = vmatpush1.msra.mxu0 0.0
    %390 = vmatprep.subr.mxu0 0.0
    %391 = vmatpush1.msra.mxu0 0.0
    %392 = vmatprep.subr.mxu0 0.0
    %393 = vmatpush1.msra.mxu0 0.0
    %394 = vmatprep.subr.mxu0 0.0
    %395 = vmatpush1.msra.mxu0 0.0
    %396 = vmatprep.subr.mxu0 0.0
    %397 = vmatpush1.msra.mxu0 0.0
    %398 = vmatprep.subr.mxu0 0.0
    %399 = vmatpush1.msra.mxu0 0.0
    %400 = vmatprep.subr.mxu0 0.0
    %401 = vmatpush1.msra.mxu0 0.0
    %402 = vmatprep.subr.mxu0 0.0
    %403 = vmatpush1.msra.mxu0 0.0
    %404 = vmatprep.subr.mxu0 0.0
    %405 = vmatpush1.msra.mxu0 0.0
    %406 = vmatprep.subr.mxu0 0.0
    %407 = vmatpush1.msra.mxu0 %v378
    %408 = vmatprep.subr.mxu0 0.0
    %409 = vmatpush1.msra.mxu0 %v377
    %410 = vmatprep.subr.mxu0 0.0
    %411 = vmatpush1.msra.mxu0 %v376
    %412 = vmatprep.subr.mxu0 0.0
    %413 = vmatpush1.msra.mxu0 %v375
    %414 = vmatprep.subr.mxu0 0.0
    %415 = vmatpush2.msra.mxu0 0.0
    %416 = vmatprep.subr.mxu0 0.0
    %417 = vmatpush2.msra.mxu0 0.0
    %418 = vmatprep.subr.mxu0 0.0
    %419 = vmatpush2.msra.mxu0 0.0
    %420 = vmatprep.subr.mxu0 0.0
    %421 = vmatpush2.msra.mxu0 0.0
    %422 = vmatprep.subr.mxu0 0.0
    %423 = vmatpush2.msra.mxu0 0.0
    %424 = vmatprep.subr.mxu0 0.0
    %425 = vmatpush2.msra.mxu0 0.0
    %426 = vmatprep.subr.mxu0 0.0
    %427 = vmatpush2.msra.mxu0 0.0
    %428 = vmatprep.subr.mxu0 0.0
    %429 = vmatpush2.msra.mxu0 0.0
    %430 = vmatprep.subr.mxu0 0.0
    %431 = vmatpush2.msra.mxu0 0.0
    %432 = vmatprep.subr.mxu0 0.0
    %433 = vmatpush2.msra.mxu0 0.0
    %434 = vmatprep.subr.mxu0 0.0
    %435 = vmatpush2.msra.mxu0 0.0
    %436 = vmatprep.subr.mxu0 0.0
    %437 = vmatpush2.msra.mxu0 0.0
    %438 = vmatprep.subr.mxu0 0.0
    %439 = vmatpush2.msra.mxu0 0.0
    %440 = vmatprep.subr.mxu0 0.0
    %441 = vmatpush2.msra.mxu0 0.0
    %442 = vmatprep.subr.mxu0 0.0
    %443 = vmatpush2.msra.mxu0 0.0
    %444 = vmatprep.subr.mxu0 0.0
    %445 = vmatpush2.msra.mxu0 0.0
    %446 = vmatprep.mubr.f32.mxu0 0.0
    %447 = vmatmul.mubr.f32.gmra.mxu0 %v380
    %v448 = vpop.f32.mrf.mxu0
    %v449 = vadd.f32 0.0, %v448
    %v450 = vpop.f32.mrf.mxu0
    %451 = vdwg.mxu0
    %453 = vrot.lane.b32.xlu0 %v449, 96
    %v454 = vpop.permute.xlu0 %453
    %v456 = vadd.f32 %v122, %v454
    %v457 = vadd.f32 %v124, %v454
    %v458 = vxor.u32 %v456, 2147483648
    %v459 = vxor.u32 %v457, 2147483648
    %v460 = vmul.f32 %v458, 1.442695
    %v461 = vpow.pop %v460
    %v462 = vmul.f32 %v459, 1.442695
    %v463 = vpow.pop %v462
    %v464 = vadd.f32 %v461, 1.0
    %v465 = vadd.f32 %v463, 1.0
    %v466 = vrcp.pop %v464
    %v467 = vmul.f32 1.0, %v466
    %v468 = vrcp.pop %v465
    %v469 = vmul.f32 1.0, %v468
    %v470 = vmul.f32 %v469, %v373
    %s471 = scalar_lea.vmem %s4, 32
    %v472 = vld [vmem:[%s471] sm:$0xff]
    %v473 = vld [vmem:[%s471 + $0x8] sm:$0xff]
    %v474 = vld [vmem:[%s471 + $0x10] sm:$0xff]
    %v475 = vld [vmem:[%s471 + $0x18] sm:$0xff]
    %v477 = vsel %vm51, %v470, 0
    %479 = vmatprep.subr.mxu0 0.0
    %480 = vmatpush1.msra.mxu0 0.0
    %481 = vmatprep.subr.mxu0 0.0
    %482 = vmatpush1.msra.mxu0 0.0
    %483 = vmatprep.subr.mxu0 0.0
    %484 = vmatpush1.msra.mxu0 0.0
    %485 = vmatprep.subr.mxu0 0.0
    %486 = vmatpush1.msra.mxu0 0.0
    %487 = vmatprep.subr.mxu0 0.0
    %488 = vmatpush1.msra.mxu0 0.0
    %489 = vmatprep.subr.mxu0 0.0
    %490 = vmatpush1.msra.mxu0 0.0
    %491 = vmatprep.subr.mxu0 0.0
    %492 = vmatpush1.msra.mxu0 0.0
    %493 = vmatprep.subr.mxu0 0.0
    %494 = vmatpush1.msra.mxu0 0.0
    %495 = vmatprep.subr.mxu0 0.0
    %496 = vmatpush1.msra.mxu0 0.0
    %497 = vmatprep.subr.mxu0 0.0
    %498 = vmatpush1.msra.mxu0 0.0
    %499 = vmatprep.subr.mxu0 0.0
    %500 = vmatpush1.msra.mxu0 0.0
    %501 = vmatprep.subr.mxu0 0.0
    %502 = vmatpush1.msra.mxu0 0.0
    %503 = vmatprep.subr.mxu0 0.0
    %504 = vmatpush1.msra.mxu0 %v475
    %505 = vmatprep.subr.mxu0 0.0
    %506 = vmatpush1.msra.mxu0 %v474
    %507 = vmatprep.subr.mxu0 0.0
    %508 = vmatpush1.msra.mxu0 %v473
    %509 = vmatprep.subr.mxu0 0.0
    %510 = vmatpush1.msra.mxu0 %v472
    %511 = vmatprep.subr.mxu0 0.0
    %512 = vmatpush2.msra.mxu0 0.0
    %513 = vmatprep.subr.mxu0 0.0
    %514 = vmatpush2.msra.mxu0 0.0
    %515 = vmatprep.subr.mxu0 0.0
    %516 = vmatpush2.msra.mxu0 0.0
    %517 = vmatprep.subr.mxu0 0.0
    %518 = vmatpush2.msra.mxu0 0.0
    %519 = vmatprep.subr.mxu0 0.0
    %520 = vmatpush2.msra.mxu0 0.0
    %521 = vmatprep.subr.mxu0 0.0
    %522 = vmatpush2.msra.mxu0 0.0
    %523 = vmatprep.subr.mxu0 0.0
    %524 = vmatpush2.msra.mxu0 0.0
    %525 = vmatprep.subr.mxu0 0.0
    %526 = vmatpush2.msra.mxu0 0.0
    %527 = vmatprep.subr.mxu0 0.0
    %528 = vmatpush2.msra.mxu0 0.0
    %529 = vmatprep.subr.mxu0 0.0
    %530 = vmatpush2.msra.mxu0 0.0
    %531 = vmatprep.subr.mxu0 0.0
    %532 = vmatpush2.msra.mxu0 0.0
    %533 = vmatprep.subr.mxu0 0.0
    %534 = vmatpush2.msra.mxu0 0.0
    %535 = vmatprep.subr.mxu0 0.0
    %536 = vmatpush2.msra.mxu0 0.0
    %537 = vmatprep.subr.mxu0 0.0
    %538 = vmatpush2.msra.mxu0 0.0
    %539 = vmatprep.subr.mxu0 0.0
    %540 = vmatpush2.msra.mxu0 0.0
    %541 = vmatprep.subr.mxu0 0.0
    %542 = vmatpush2.msra.mxu0 0.0
    %543 = vmatprep.mubr.f32.mxu0 0.0
    %544 = vmatmul.mubr.f32.gmra.mxu0 %v477
    %v545 = vpop.f32.mrf.mxu0
    %v546 = vadd.f32 0.0, %v545
    %v547 = vpop.f32.mrf.mxu0
    %548 = vdwg.mxu0
    %550 = vrot.lane.b32.xlu0 %v546, 32
    %v551 = vpop.permute.xlu0 %550
    %v553 = vadd.f32 %v124, %v551
    %v554 = vtanh.pop %v553
    %v555 = vsub.f32 1.0, %v467
    %556 = vrot.lane.b32.xlu0 %v373, 96
    %v557 = vpop.permute.xlu0 %556
    %v559 = vmul.f32 %v555, %v557
    %561 = vrot.lane.b32.xlu0 %v554, 64
    %v562 = vpop.permute.xlu0 %561
    %v564 = vmul.f32 %v467, %v562
    %v565 = vadd.f32 %v559, %v564
    %s566 = scalar_lea.vmem %s3, 64
    %v567 = vld [vmem:[%s566] sm:$0xff]
    %v568 = vld [vmem:[%s566 + $0x8] sm:$0xff]
    %v569 = vld [vmem:[%s566 + $0x10] sm:$0xff]
    %v570 = vld [vmem:[%s566 + $0x18] sm:$0xff]
    %572 = vrot.lane.b32.xlu0 %v565, 32
    %v573 = vpop.permute.xlu0 %572
    %v574 = vsel %vm51, %v573, 0
    %576 = vmatprep.subr.mxu0 0.0
    %577 = vmatpush1.msra.mxu0 0.0
    %578 = vmatprep.subr.mxu0 0.0
    %579 = vmatpush1.msra.mxu0 0.0
    %580 = vmatprep.subr.mxu0 0.0
    %581 = vmatpush1.msra.mxu0 0.0
    %582 = vmatprep.subr.mxu0 0.0
    %583 = vmatpush1.msra.mxu0 0.0
    %584 = vmatprep.subr.mxu0 0.0
    %585 = vmatpush1.msra.mxu0 0.0
    %586 = vmatprep.subr.mxu0 0.0
    %587 = vmatpush1.msra.mxu0 0.0
    %588 = vmatprep.subr.mxu0 0.0
    %589 = vmatpush1.msra.mxu0 0.0
    %590 = vmatprep.subr.mxu0 0.0
    %591 = vmatpush1.msra.mxu0 0.0
    %592 = vmatprep.subr.mxu0 0.0
    %593 = vmatpush1.msra.mxu0 0.0
    %594 = vmatprep.subr.mxu0 0.0
    %595 = vmatpush1.msra.mxu0 0.0
    %596 = vmatprep.subr.mxu0 0.0
    %597 = vmatpush1.msra.mxu0 0.0
    %598 = vmatprep.subr.mxu0 0.0
    %599 = vmatpush1.msra.mxu0 0.0
    %600 = vmatprep.subr.mxu0 0.0
    %601 = vmatpush1.msra.mxu0 %v570
    %602 = vmatprep.subr.mxu0 0.0
    %603 = vmatpush1.msra.mxu0 %v569
    %604 = vmatprep.subr.mxu0 0.0
    %605 = vmatpush1.msra.mxu0 %v568
    %606 = vmatprep.subr.mxu0 0.0
    %607 = vmatpush1.msra.mxu0 %v567
    %608 = vmatprep.subr.mxu0 0.0
    %609 = vmatpush2.msra.mxu0 0.0
    %610 = vmatprep.subr.mxu0 0.0
    %611 = vmatpush2.msra.mxu0 0.0
    %612 = vmatprep.subr.mxu0 0.0
    %613 = vmatpush2.msra.mxu0 0.0
    %614 = vmatprep.subr.mxu0 0.0
    %615 = vmatpush2.msra.mxu0 0.0
    %616 = vmatprep.subr.mxu0 0.0
    %617 = vmatpush2.msra.mxu0 0.0
    %618 = vmatprep.subr.mxu0 0.0
    %619 = vmatpush2.msra.mxu0 0.0
    %620 = vmatprep.subr.mxu0 0.0
    %621 = vmatpush2.msra.mxu0 0.0
    %622 = vmatprep.subr.mxu0 0.0
    %623 = vmatpush2.msra.mxu0 0.0
    %624 = vmatprep.subr.mxu0 0.0
    %625 = vmatpush2.msra.mxu0 0.0
    %626 = vmatprep.subr.mxu0 0.0
    %627 = vmatpush2.msra.mxu0 0.0
    %628 = vmatprep.subr.mxu0 0.0
    %629 = vmatpush2.msra.mxu0 0.0
    %630 = vmatprep.subr.mxu0 0.0
    %631 = vmatpush2.msra.mxu0 0.0
    %632 = vmatprep.subr.mxu0 0.0
    %633 = vmatpush2.msra.mxu0 0.0
    %634 = vmatprep.subr.mxu0 0.0
    %635 = vmatpush2.msra.mxu0 0.0
    %636 = vmatprep.subr.mxu0 0.0
    %637 = vmatpush2.msra.mxu0 0.0
    %638 = vmatprep.subr.mxu0 0.0
    %639 = vmatpush2.msra.mxu0 0.0
    %640 = vmatprep.mubr.f32.mxu0 0.0
    %641 = vmatmul.mubr.f32.gmra.mxu0 %v574
    %v642 = vpop.f32.mrf.mxu0
    %v643 = vadd.f32 0.0, %v642
    %v644 = vpop.f32.mrf.mxu0
    %645 = vdwg.mxu0
    %647 = vrot.lane.b32.xlu0 %v643, 64
    %v648 = vpop.permute.xlu0 %647
    %v650 = vadd.f32 %v124, %v648
    %v651 = vxor.u32 %v650, 2147483648
    %v652 = vmul.f32 %v651, 1.442695
    %v653 = vpow.pop %v652
    %v654 = vadd.f32 %v653, 1.0
    %v655 = vrcp.pop %v654
    %v656 = vmul.f32 1.0, %v655
    %v657 = vmul.f32 %v656, %v565
    %s658 = scalar_lea.vmem %s4, 64
    %v659 = vld [vmem:[%s658] sm:$0xff]
    %v660 = vld [vmem:[%s658 + $0x8] sm:$0xff]
    %v661 = vld [vmem:[%s658 + $0x10] sm:$0xff]
    %v662 = vld [vmem:[%s658 + $0x18] sm:$0xff]
    %664 = vrot.lane.b32.xlu0 %v657, 32
    %v665 = vpop.permute.xlu0 %664
    %v666 = vsel %vm51, %v665, 0
    %668 = vmatprep.subr.mxu0 0.0
    %669 = vmatpush1.msra.mxu0 0.0
    %670 = vmatprep.subr.mxu0 0.0
    %671 = vmatpush1.msra.mxu0 0.0
    %672 = vmatprep.subr.mxu0 0.0
    %673 = vmatpush1.msra.mxu0 0.0
    %674 = vmatprep.subr.mxu0 0.0
    %675 = vmatpush1.msra.mxu0 0.0
    %676 = vmatprep.subr.mxu0 0.0
    %677 = vmatpush1.msra.mxu0 0.0
    %678 = vmatprep.subr.mxu0 0.0
    %679 = vmatpush1.msra.mxu0 0.0
    %680 = vmatprep.subr.mxu0 0.0
    %681 = vmatpush1.msra.mxu0 0.0
    %682 = vmatprep.subr.mxu0 0.0
    %683 = vmatpush1.msra.mxu0 0.0
    %684 = vmatprep.subr.mxu0 0.0
    %685 = vmatpush1.msra.mxu0 0.0
    %686 = vmatprep.subr.mxu0 0.0
    %687 = vmatpush1.msra.mxu0 0.0
    %688 = vmatprep.subr.mxu0 0.0
    %689 = vmatpush1.msra.mxu0 0.0
    %690 = vmatprep.subr.mxu0 0.0
    %691 = vmatpush1.msra.mxu0 0.0
    %692 = vmatprep.subr.mxu0 0.0
    %693 = vmatpush1.msra.mxu0 %v662
    %694 = vmatprep.subr.mxu0 0.0
    %695 = vmatpush1.msra.mxu0 %v661
    %696 = vmatprep.subr.mxu0 0.0
    %697 = vmatpush1.msra.mxu0 %v660
    %698 = vmatprep.subr.mxu0 0.0
    %699 = vmatpush1.msra.mxu0 %v659
    %700 = vmatprep.subr.mxu0 0.0
    %701 = vmatpush2.msra.mxu0 0.0
    %702 = vmatprep.subr.mxu0 0.0
    %703 = vmatpush2.msra.mxu0 0.0
    %704 = vmatprep.subr.mxu0 0.0
    %705 = vmatpush2.msra.mxu0 0.0
    %706 = vmatprep.subr.mxu0 0.0
    %707 = vmatpush2.msra.mxu0 0.0
    %708 = vmatprep.subr.mxu0 0.0
    %709 = vmatpush2.msra.mxu0 0.0
    %710 = vmatprep.subr.mxu0 0.0
    %711 = vmatpush2.msra.mxu0 0.0
    %712 = vmatprep.subr.mxu0 0.0
    %713 = vmatpush2.msra.mxu0 0.0
    %714 = vmatprep.subr.mxu0 0.0
    %715 = vmatpush2.msra.mxu0 0.0
    %716 = vmatprep.subr.mxu0 0.0
    %717 = vmatpush2.msra.mxu0 0.0
    %718 = vmatprep.subr.mxu0 0.0
    %719 = vmatpush2.msra.mxu0 0.0
    %720 = vmatprep.subr.mxu0 0.0
    %721 = vmatpush2.msra.mxu0 0.0
    %722 = vmatprep.subr.mxu0 0.0
    %723 = vmatpush2.msra.mxu0 0.0
    %724 = vmatprep.subr.mxu0 0.0
    %725 = vmatpush2.msra.mxu0 0.0
    %726 = vmatprep.subr.mxu0 0.0
    %727 = vmatpush2.msra.mxu0 0.0
    %728 = vmatprep.subr.mxu0 0.0
    %729 = vmatpush2.msra.mxu0 0.0
    %730 = vmatprep.subr.mxu0 0.0
    %731 = vmatpush2.msra.mxu0 0.0
    %732 = vmatprep.mubr.f32.mxu0 0.0
    %733 = vmatmul.mubr.f32.gmra.mxu0 %v666
    %v734 = vpop.f32.mrf.mxu0
    %v735 = vadd.f32 0.0, %v734
    %v736 = vpop.f32.mrf.mxu0
    %737 = vdwg.mxu0
    %v738 = vadd.f32 %v193, %v735
    %v739 = vtanh.pop %v738
    %v740 = vsub.f32 1.0, %v656
    %741 = vrot.lane.b32.xlu0 %v565, 96
    %v742 = vpop.permute.xlu0 %741
    %v744 = vmul.f32 %v740, %v742
    %746 = vrot.lane.b32.xlu0 %v739, 64
    %v747 = vpop.permute.xlu0 %746
    %v749 = vmul.f32 %v656, %v747
    %v750 = vadd.f32 %v744, %v749
    %752 = vrot.lane.b32.xlu0 %v750, 64
    %v753 = vpop.permute.xlu0 %752
    %755 = vst.msk [vmem:[#allocation2] sm:$0xff] %vm51, %v753
    // Predicated region
    $region22: #{_forward.1} parent=1 // pred_check
      _
    $region23: #{_forward.1} parent=1 // pred_check_branch
      %757 = sbr.rel (0) target = $region25
    $region24: #{_forward.1} parent=1 // pred_region
      %s759 = ssub.s32 128, 128
      %760 = vsyncadd [#allocation3], %s759
      %s762 = sshll.u32 [#allocation2], 4
      %s763 = int_to_ptr.vmem [resolvable:$true] %s762
      %765 = dma.vmem_to_hbm [thread:$0]  %s763, 128, %s5, [#allocation3]
    $region25: #{_forward.1} parent=1 // pred_fallthru
      _
    // Predicated region
    $region26: #{_forward.1} parent=1 // pred_check
      _
    $region27: #{_forward.1} parent=1 // pred_check_branch
      %767 = sbr.rel (0) target = $region29
    $region28: #{_forward.1} parent=1 // pred_region
      %768 = dma.done [#allocation3], 128
    $region29: #{_forward.1} parent=1 // pred_fallthru
      _
    %769 = vsyncpa [#allocation3], 1

</llo_original>
